<compile_context>
chip_gen: v7x
topology: tpu7x:2x2x1
jax: 0.10.0
libtpu: 0.0.40
codegen_flags: <defaults>
</compile_context>

<pallas_src>
import jax
import jax.numpy as jnp
from jax import lax
from jax.experimental import pallas as pl
from jax.experimental.pallas import tpu as pltpu


def _round_up(x, m):
    return ((x + m - 1) // m) * m


def _make_mlp_kernel(tm, rc):
    """Kernel processing a (tm, Fin) batch tile in row sub-chunks of rc."""
    assert tm % rc == 0
    n_chunks = tm // rc

    def kernel(x_ref, w1_ref, b1_ref, w2_ref, b2_ref, o_ref):
        # Hoisted out of the chunk loop (JAX does not CSE repeated loads).
        b1 = b1_ref[...]                                       # (1, H1) f32
        b2 = b2_ref[...]                                       # (1, H2) f32

        def chunk(c):
            r0 = pl.multiple_of(c * rc, rc)
            # f32 rows from VMEM, cast to bf16 in-kernel (cheap VPU filler).
            xs = x_ref[pl.ds(r0, rc), :].astype(w1_ref.dtype)  # (rc, Fin) bf16
            # Layer 0: Linear (bf16 MXU, f32 acc) + bias + ReLU; Dropout == id.
            h = jnp.dot(xs, w1_ref[...],
                        preferred_element_type=jnp.float32)    # (rc, H1) f32
            h = jnp.maximum(h + b1, 0.0)
            # Layer 1: Linear (bf16 MXU, f32 acc) + bias + ReLU; Dropout == id.
            y = jnp.dot(h.astype(w2_ref.dtype), w2_ref[...],
                        preferred_element_type=jnp.float32)    # (rc, H2) f32
            y = jnp.maximum(y + b2, 0.0)
            o_ref[pl.ds(r0, rc), :] = y.astype(o_ref.dtype)

        if n_chunks == 1:
            chunk(0)
        else:
            def body(c, carry):
                chunk(c)
                return carry
            # Unroll capped at 2 so interleaved chunks stay within the
            # 64-vreg file (no spill loads/stores stealing vld/vst slots).
            lax.fori_loop(0, n_chunks, body, 0, unroll=2)

    return kernel


def _choose_tiles(B):
    """Pick batch tile (tm) and in-kernel row sub-chunk (rc)."""
    if B <= 128:
        tm = _round_up(B, 8)                      # single grid step
    else:
        # >= 2 "parallel" grid steps so both v7x TensorCores get work; up to
        # 512-row tiles to amortize the ~0.35 us per-grid-step overhead.
        tm = min(512, _round_up(-(-B // 2), 128))
    rc = 64 if tm % 64 == 0 else tm               # small tiles: one chunk
    return tm, rc


@jax.jit
def mlp_hp_forward(x, w1, b1, w2, b2):
    """x: (B, Fin) f32; w1: (Fin, H1); b1: (H1,); w2: (H1, H2); b2: (H2,)."""
    B, Fin = x.shape
    H1 = w1.shape[1]
    H2 = w2.shape[1]
    out_dtype = x.dtype

    tm, rc = _choose_tiles(B)
    grid = (pl.cdiv(B, tm),)                      # partial last block is masked

    # Weights as bf16 MXU operands (tiny, VMEM-resident); biases stay f32.
    w1_bf = w1.astype(jnp.bfloat16)
    w2_bf = w2.astype(jnp.bfloat16)
    b1_2d = b1.reshape(1, H1).astype(jnp.float32)
    b2_2d = b2.reshape(1, H2).astype(jnp.float32)

    kernel = _make_mlp_kernel(tm, rc)

    out = pl.pallas_call(
        kernel,
        out_shape=jax.ShapeDtypeStruct((B, H2), out_dtype),
        grid_spec=pltpu.PrefetchScalarGridSpec(
            num_scalar_prefetch=0,
            grid=grid,
            in_specs=[
                pl.BlockSpec((tm, Fin), lambda i: (i, 0)),   # x tile (f32, unpadded)
                pl.BlockSpec((Fin, H1), lambda i: (0, 0)),   # W1 (resident)
                pl.BlockSpec((1, H1), lambda i: (0, 0)),     # b1
                pl.BlockSpec((H1, H2), lambda i: (0, 0)),    # W2 (resident)
                pl.BlockSpec((1, H2), lambda i: (0, 0)),     # b2
            ],
            out_specs=pl.BlockSpec((tm, H2), lambda i: (i, 0)),
        ),
        compiler_params=pltpu.CompilerParams(
            dimension_semantics=("parallel",),
        ),
    )(x, w1_bf, b1_2d, w2_bf, b2_2d)

    return out


def reference_forward(x, w1, b1, w2, b2):
    h = jnp.maximum(x @ w1 + b1, 0.0)
    y = jnp.maximum(h @ w2 + b2, 0.0)
    return y


if __name__ == "__main__":
    # Small shapes consistent with the module's forward: (batch, in_features)
    B, IN_FEATURES = 16, 32
    H1, H2 = 128, 256           # trial-sampled hidden widths (step 16, in [128, 512])

    key = jax.random.PRNGKey(0)
    k_x, k_w1, k_b1, k_w2, k_b2 = jax.random.split(key, 5)

    x = jax.random.normal(k_x, (B, IN_FEATURES), dtype=jnp.float32)

    # nn.Linear init style: U(-1/sqrt(fan_in), 1/sqrt(fan_in)); weights stored
    # pre-transposed as (in, out) for the kernel's x @ W convention.
    lim1 = 1.0 / (IN_FEATURES ** 0.5)
    w1 = jax.random.uniform(k_w1, (IN_FEATURES, H1), jnp.float32, -lim1, lim1)
    b1 = jax.random.uniform(k_b1, (H1,), jnp.float32, -lim1, lim1)
    lim2 = 1.0 / (H1 ** 0.5)
    w2 = jax.random.uniform(k_w2, (H1, H2), jnp.float32, -lim2, lim2)
    b2 = jax.random.uniform(k_b2, (H2,), jnp.float32, -lim2, lim2)

    out = mlp_hp_forward(x, w1, b1, w2, b2)
    out = jax.block_until_ready(out)

    ref = reference_forward(x, w1, b1, w2, b2)
    assert out.shape == (B, H2)
    # bf16 MXU operands with f32 accumulation -> loosened tolerances.
    assert jnp.allclose(out, ref, atol=5e-2, rtol=2e-2), "mismatch vs reference"

    print("KERNEL_OK")
</pallas_src>

<mosaic_0001>
module attributes {stable_mosaic.version = 11 : i64} {
  func.func @kernel(%arg0: i32, %arg1: memref<16x32xf32, #tpu.memory_space<vmem>>, %arg2: memref<32x128xbf16, #tpu.memory_space<vmem>>, %arg3: memref<1x128xf32, #tpu.memory_space<vmem>>, %arg4: memref<128x256xbf16, #tpu.memory_space<vmem>>, %arg5: memref<1x256xf32, #tpu.memory_space<vmem>>, %arg6: memref<16x256xf32, #tpu.memory_space<vmem>>) attributes {dimension_semantics = [#tpu.dimension_semantics<parallel>], iteration_bounds = array<i64: 1>, scalar_prefetch = 0 : i64, scratch_operands = 0 : i64, tpu.core_type = #tpu.core_type<tc>, window_params = [{transform_indices = @transform_0, window_bounds = array<i64: 16, 32>}, {pipeline_mode = #tpu.pipeline_mode<synchronous>, transform_indices = @transform_1, window_bounds = array<i64: 32, 128>}, {pipeline_mode = #tpu.pipeline_mode<synchronous>, transform_indices = @transform_2, window_bounds = array<i64: 1, 128>}, {pipeline_mode = #tpu.pipeline_mode<synchronous>, transform_indices = @transform_3, window_bounds = array<i64: 128, 256>}, {pipeline_mode = #tpu.pipeline_mode<synchronous>, transform_indices = @transform_4, window_bounds = array<i64: 1, 256>}, {transform_indices = @transform_5, window_bounds = array<i64: 16, 256>}]} {
    %c0 = arith.constant 0 : index
    %c0_0 = arith.constant 0 : index
    %0 = vector.load %arg3[%c0, %c0_0] : memref<1x128xf32, #tpu.memory_space<vmem>>, vector<1x128xf32>
    %c0_1 = arith.constant 0 : index
    %c0_2 = arith.constant 0 : index
    %1 = vector.load %arg5[%c0_1, %c0_2] : memref<1x256xf32, #tpu.memory_space<vmem>>, vector<1x256xf32>
    %c0_i32 = arith.constant 0 : i32
    %2 = tpu.assume_multiple %c0_i32, 16 : i32
    %3 = arith.index_cast %2 : i32 to index
    %c0_3 = arith.constant 0 : index
    %4 = vector.load %arg1[%3, %c0_3] : memref<16x32xf32, #tpu.memory_space<vmem>>, vector<16x32xf32>
    %5 = arith.truncf %4 : vector<16x32xf32> to vector<16x32xbf16>
    %c0_4 = arith.constant 0 : index
    %c0_5 = arith.constant 0 : index
    %6 = vector.load %arg2[%c0_4, %c0_5] : memref<32x128xbf16, #tpu.memory_space<vmem>>, vector<32x128xbf16>
    %cst = arith.constant dense<0.000000e+00> : vector<16x128xf32>
    %7 = tpu.matmul %5, %6, %cst {dimension_numbers = #tpu.dot_dimension_numbers<[1], [0], [0], [1], [0, 0, 1, 1], [], []>} : vector<16x32xbf16>, vector<32x128xbf16>, vector<16x128xf32> -> vector<16x128xf32>
    %8 = vector.broadcast %0 : vector<1x128xf32> to vector<16x128xf32>
    %9 = arith.addf %7, %8 : vector<16x128xf32>
    %cst_6 = arith.constant 0.000000e+00 : f32
    %10 = vector.broadcast %cst_6 : f32 to vector<16x128xf32>
    %11 = arith.maximumf %9, %10 : vector<16x128xf32>
    %12 = arith.truncf %11 : vector<16x128xf32> to vector<16x128xbf16>
    %c0_7 = arith.constant 0 : index
    %c0_8 = arith.constant 0 : index
    %13 = vector.load %arg4[%c0_7, %c0_8] : memref<128x256xbf16, #tpu.memory_space<vmem>>, vector<128x256xbf16>
    %cst_9 = arith.constant dense<0.000000e+00> : vector<16x256xf32>
    %14 = tpu.matmul %12, %13, %cst_9 {dimension_numbers = #tpu.dot_dimension_numbers<[1], [0], [0], [1], [0, 0, 1, 1], [], []>} : vector<16x128xbf16>, vector<128x256xbf16>, vector<16x256xf32> -> vector<16x256xf32>
    %15 = vector.broadcast %1 : vector<1x256xf32> to vector<16x256xf32>
    %16 = arith.addf %14, %15 : vector<16x256xf32>
    %cst_10 = arith.constant 0.000000e+00 : f32
    %17 = vector.broadcast %cst_10 : f32 to vector<16x256xf32>
    %18 = arith.maximumf %16, %17 : vector<16x256xf32>
    %19 = arith.index_cast %2 : i32 to index
    %c0_11 = arith.constant 0 : index
    %20 = vector.load %arg6[%19, %c0_11] : memref<16x256xf32, #tpu.memory_space<vmem>>, vector<16x256xf32>
    tpu.vector_store %arg6[%19, %c0_11], %18 {strides = array<i32>} : memref<16x256xf32, #tpu.memory_space<vmem>>, vector<16x256xf32>,
    return
  }
  func.func @transform_0(%arg0: i32) -> (i32, i32) {
    %c0_i32 = arith.constant 0 : i32
    %c0_i32_0 = arith.constant 0 : i32
    return %arg0, %c0_i32 : i32, i32
  }
  func.func @transform_1(%arg0: i32) -> (i32, i32) {
    %c0_i32 = arith.constant 0 : i32
    %c0_i32_0 = arith.constant 0 : i32
    %c0_i32_1 = arith.constant 0 : i32
    return %c0_i32, %c0_i32_0 : i32, i32
  }
  func.func @transform_2(%arg0: i32) -> (i32, i32) {
    %c0_i32 = arith.constant 0 : i32
    %c0_i32_0 = arith.constant 0 : i32
    %c0_i32_1 = arith.constant 0 : i32
    return %c0_i32, %c0_i32_0 : i32, i32
  }
  func.func @transform_3(%arg0: i32) -> (i32, i32) {
    %c0_i32 = arith.constant 0 : i32
    %c0_i32_0 = arith.constant 0 : i32
    %c0_i32_1 = arith.constant 0 : i32
    return %c0_i32, %c0_i32_0 : i32, i32
  }
  func.func @transform_4(%arg0: i32) -> (i32, i32) {
    %c0_i32 = arith.constant 0 : i32
    %c0_i32_0 = arith.constant 0 : i32
    %c0_i32_1 = arith.constant 0 : i32
    return %c0_i32, %c0_i32_0 : i32, i32
  }
  func.func @transform_5(%arg0: i32) -> (i32, i32) {
    %c0_i32 = arith.constant 0 : i32
    %c0_i32_0 = arith.constant 0 : i32
    return %arg0, %c0_i32 : i32, i32
  }
}

</mosaic_0001>

<llo_original>
// kernel: mlp_hp_forward.1
$region0: #{mlp_hp_forward.1}
  #allocation0 [shape = 'u32[]', space=smem, size = 0x4, offset = 0x4, fixed_abs, tag = 'smem constant byte address 0x4 - core index']
  #allocation1 [shape = 'u32[144,128]{1,0:T(1,128)}', space=vmem, size = 0x12000, scoped, tag = 'internal scratch']
  %s0 = inlined_call_operand.vmem [shape: f32[16,32], index: 0, kind: input, shape index: {}]
  %s1 = inlined_call_operand.vmem [shape: bf16[32,128], index: 1, kind: input, shape index: {}]
  %s2 = inlined_call_operand.vmem [shape: f32[1,128], index: 2, kind: input, shape index: {}]
  %s3 = inlined_call_operand.vmem [shape: bf16[128,256], index: 3, kind: input, shape index: {}]
  %s4 = inlined_call_operand.vmem [shape: f32[1,256], index: 4, kind: input, shape index: {}]
  %s5 = inlined_call_operand.hbm [shape: f32[16,256], index: 5, kind: output, shape index: {}]
  %s6 = sld [smem:[#allocation0]]
  $region30: #{mlp_hp_forward.1} parent=0
    _
  %s8 = ssub.s32 1, %s6
  %s9 = scalar_select 0, %s8, %s6
  $region1: #{mlp_hp_forward.1} parent=0
    #allocation2 [shape = 'u8[16384]{0}', space=vmem, size = 0x4000, scoped, tag = 'output window, operand 0, single buffered']
    #allocation3 [shape = 's32[1]{0}', space=sflag, size = 0x4, scoped, tag = 'scoped memory for mlp_hp_forward.1']
    %10 = vsyncpa [#allocation3], 0
    // Predicated region
    $region2: #{mlp_hp_forward.1} parent=1 // pred_check
      _
    $region3: #{mlp_hp_forward.1} parent=1 // pred_check_branch
      %12 = sbr.rel (0) target = $region5
    $region4: #{mlp_hp_forward.1} parent=1 // pred_region
      _
    $region5: #{mlp_hp_forward.1} parent=1 // pred_fallthru
      _
    // Predicated region
    $region6: #{mlp_hp_forward.1} parent=1 // pred_check
      _
    $region7: #{mlp_hp_forward.1} parent=1 // pred_check_branch
      %14 = sbr.rel (0) target = $region9
    $region8: #{mlp_hp_forward.1} parent=1 // pred_region
      _
    $region9: #{mlp_hp_forward.1} parent=1 // pred_fallthru
      _
    // Predicated region
    $region10: #{mlp_hp_forward.1} parent=1 // pred_check
      _
    $region11: #{mlp_hp_forward.1} parent=1 // pred_check_branch
      %16 = sbr.rel (0) target = $region13
    $region12: #{mlp_hp_forward.1} parent=1 // pred_region
      _
    $region13: #{mlp_hp_forward.1} parent=1 // pred_fallthru
      _
    // Predicated region
    $region14: #{mlp_hp_forward.1} parent=1 // pred_check
      _
    $region15: #{mlp_hp_forward.1} parent=1 // pred_check_branch
      %18 = sbr.rel (0) target = $region17
    $region16: #{mlp_hp_forward.1} parent=1 // pred_region
      _
    $region17: #{mlp_hp_forward.1} parent=1 // pred_fallthru
      _
    // Predicated region
    $region18: #{mlp_hp_forward.1} parent=1 // pred_check
      _
    $region19: #{mlp_hp_forward.1} parent=1 // pred_check_branch
      %20 = sbr.rel (0) target = $region21
    $region20: #{mlp_hp_forward.1} parent=1 // pred_region
      _
    $region21: #{mlp_hp_forward.1} parent=1 // pred_fallthru
      _
    %v22 = vld [vmem:[%s2] sm:$0x1]
    %v23 = vld [vmem:[%s4] sm:$0x3]
    %v24 = vld [vmem:[%s0] sm:$0xff]
    %v25 = vld [vmem:[%s0 + $0x8] sm:$0xff]
    %v26 = vpack.c.bf16 %v25, %v24
    %v27 = vld [vmem:[%s1] sm:$0xf]
    %v28 = vld [vmem:[%s1 + $0x4] sm:$0xf]
    %v29 = vld [vmem:[%s1 + $0x8] sm:$0xf]
    %v30 = vld [vmem:[%s1 + $0xc] sm:$0xf]
    %v32 = vlaneseq
    %v33 = vshrl.u32 %v32, 7
    %v34 = vsub.s32 0, %v33
    %v35 = vrot.slane %v22, %v34
    %v41 = vunpack.c.l.b16 %v27
    %v42 = vunpack.c.l.b16 %v28
    %v43 = vunpack.c.l.b16 %v29
    %v44 = vunpack.c.l.b16 %v30
    %v45 = vpack.c.b16 %v42, %v41
    %v46 = vpack.c.b16 %v44, %v43
    %vm49 = vcmask 261120
    %v51 = vsel %vm49, %v26, 0
    %53 = vmatprep.subr.bf16.mxu0 0
    %54 = vmatpush1.bf16.msra.mxu0 %v45
    %55 = vmatprep.subr.bf16.mxu0 0
    %56 = vmatpush1.bf16.msra.mxu0 %v46
    %57 = vmatprep.subr.bf16.mxu0 0
    %58 = vmatpush1.bf16.msra.mxu0 0
    %59 = vmatprep.subr.bf16.mxu0 0
    %60 = vmatpush1.bf16.msra.mxu0 0
    %61 = vmatprep.subr.bf16.mxu0 0
    %62 = vmatpush1.bf16.msra.mxu0 0
    %63 = vmatprep.subr.bf16.mxu0 0
    %64 = vmatpush1.bf16.msra.mxu0 0
    %65 = vmatprep.subr.bf16.mxu0 0
    %66 = vmatpush1.bf16.msra.mxu0 0
    %67 = vmatprep.subr.bf16.mxu0 0
    %68 = vmatpush1.bf16.msra.mxu0 0
    %69 = vmatprep.subr.bf16.mxu0 0
    %70 = vmatpush1.bf16.msra.mxu0 0
    %71 = vmatprep.subr.bf16.mxu0 0
    %72 = vmatpush1.bf16.msra.mxu0 0
    %73 = vmatprep.subr.bf16.mxu0 0
    %74 = vmatpush1.bf16.msra.mxu0 0
    %75 = vmatprep.subr.bf16.mxu0 0
    %76 = vmatpush1.bf16.msra.mxu0 0
    %77 = vmatprep.subr.bf16.mxu0 0
    %78 = vmatpush1.bf16.msra.mxu0 0
    %79 = vmatprep.subr.bf16.mxu0 0
    %80 = vmatpush1.bf16.msra.mxu0 0
    %81 = vmatprep.subr.bf16.mxu0 0
    %82 = vmatpush1.bf16.msra.mxu0 0
    %83 = vmatprep.subr.bf16.mxu0 0
    %84 = vmatpush1.bf16.msra.mxu0 0
    %85 = vmatprep.mubr.bf16.mxu0 0
    %86 = vmatmul.mubr.bf16.gmra.mrb[0].mxu0 %v51
    %v87 = vpop.f32.mrb[0].mxu0
    %v88 = vadd.f32 %v35, %v87
    %v89 = vpop.f32.mrb[0].mxu0
    %v90 = vpop.f32.mrb[0].mxu0
    %v91 = vadd.f32 %v35, %v90
    %v92 = vpop.f32.mrb[0].mxu0
    %93 = vdwg.mxu0
    %v94 = vmax.f32 %v88, 0.0
    %v95 = vmax.f32 %v91, 0.0
    %v96 = vpack.c.bf16 %v95, %v94
    %v97 = vld [vmem:[%s3] sm:$0xff]
    %v98 = vld [vmem:[%s3 + $0x8] sm:$0xff]
    %v99 = vld [vmem:[%s3 + $0x10] sm:$0xff]
    %v100 = vld [vmem:[%s3 + $0x18] sm:$0xff]
    %v101 = vld [vmem:[%s3 + $0x20] sm:$0xff]
    %v102 = vld [vmem:[%s3 + $0x28] sm:$0xff]
    %v103 = vld [vmem:[%s3 + $0x30] sm:$0xff]
    %v104 = vld [vmem:[%s3 + $0x38] sm:$0xff]
    %v105 = vld [vmem:[%s3 + $0x40] sm:$0xff]
    %v106 = vld [vmem:[%s3 + $0x48] sm:$0xff]
    %v107 = vld [vmem:[%s3 + $0x50] sm:$0xff]
    %v108 = vld [vmem:[%s3 + $0x58] sm:$0xff]
    %v109 = vld [vmem:[%s3 + $0x60] sm:$0xff]
    %v110 = vld [vmem:[%s3 + $0x68] sm:$0xff]
    %v111 = vld [vmem:[%s3 + $0x70] sm:$0xff]
    %v112 = vld [vmem:[%s3 + $0x78] sm:$0xff]
    %v114 = vlaneseq
    %v115 = vshrl.u32 %v114, 7
    %v116 = vsub.s32 0, %v115
    %v117 = vrot.slane %v23, %v116
    %v118 = vlaneseq
    %v119 = vshrl.u32 %v118, 7
    %v120 = vsub.s32 1, %v119
    %v121 = vrot.slane %v23, %v120
    %v140 = vunpack.c.l.b16 %v97
    %v141 = vunpack.c.h.b16 %v97
    %v142 = vunpack.c.l.b16 %v98
    %v143 = vunpack.c.h.b16 %v98
    %v144 = vunpack.c.l.b16 %v99
    %v145 = vunpack.c.h.b16 %v99
    %v146 = vunpack.c.l.b16 %v100
    %v147 = vunpack.c.h.b16 %v100
    %v148 = vunpack.c.l.b16 %v101
    %v149 = vunpack.c.h.b16 %v101
    %v150 = vunpack.c.l.b16 %v102
    %v151 = vunpack.c.h.b16 %v102
    %v152 = vunpack.c.l.b16 %v103
    %v153 = vunpack.c.h.b16 %v103
    %v154 = vunpack.c.l.b16 %v104
    %v155 = vunpack.c.h.b16 %v104
    %v156 = vunpack.c.l.b16 %v105
    %v157 = vunpack.c.h.b16 %v105
    %v158 = vunpack.c.l.b16 %v106
    %v159 = vunpack.c.h.b16 %v106
    %v160 = vunpack.c.l.b16 %v107
    %v161 = vunpack.c.h.b16 %v107
    %v162 = vunpack.c.l.b16 %v108
    %v163 = vunpack.c.h.b16 %v108
    %v164 = vunpack.c.l.b16 %v109
    %v165 = vunpack.c.h.b16 %v109
    %v166 = vunpack.c.l.b16 %v110
    %v167 = vunpack.c.h.b16 %v110
    %v168 = vunpack.c.l.b16 %v111
    %v169 = vunpack.c.h.b16 %v111
    %v170 = vunpack.c.l.b16 %v112
    %v171 = vunpack.c.h.b16 %v112
    %v172 = vpack.c.b16 %v142, %v140
    %v173 = vpack.c.b16 %v143, %v141
    %v174 = vpack.c.b16 %v146, %v144
    %v175 = vpack.c.b16 %v147, %v145
    %v176 = vpack.c.b16 %v150, %v148
    %v177 = vpack.c.b16 %v151, %v149
    %v178 = vpack.c.b16 %v154, %v152
    %v179 = vpack.c.b16 %v155, %v153
    %v180 = vpack.c.b16 %v158, %v156
    %v181 = vpack.c.b16 %v159, %v157
    %v182 = vpack.c.b16 %v162, %v160
    %v183 = vpack.c.b16 %v163, %v161
    %v184 = vpack.c.b16 %v166, %v164
    %v185 = vpack.c.b16 %v167, %v165
    %v186 = vpack.c.b16 %v170, %v168
    %v187 = vpack.c.b16 %v171, %v169
    %204 = vmatprep.subr.bf16.mxu0 %v173
    %205 = vmatpush1.bf16.msra.mxu0 %v172
    %206 = vmatprep.subr.bf16.mxu0 %v175
    %207 = vmatpush1.bf16.msra.mxu0 %v174
    %208 = vmatprep.subr.bf16.mxu0 %v177
    %209 = vmatpush1.bf16.msra.mxu0 %v176
    %210 = vmatprep.subr.bf16.mxu0 %v179
    %211 = vmatpush1.bf16.msra.mxu0 %v178
    %212 = vmatprep.subr.bf16.mxu0 %v181
    %213 = vmatpush1.bf16.msra.mxu0 %v180
    %214 = vmatprep.subr.bf16.mxu0 %v183
    %215 = vmatpush1.bf16.msra.mxu0 %v182
    %216 = vmatprep.subr.bf16.mxu0 %v185
    %217 = vmatpush1.bf16.msra.mxu0 %v184
    %218 = vmatprep.subr.bf16.mxu0 %v187
    %219 = vmatpush1.bf16.msra.mxu0 %v186
    %220 = vmatprep.subr.bf16.mxu0 0
    %221 = vmatpush1.bf16.msra.mxu0 0
    %222 = vmatprep.subr.bf16.mxu0 0
    %223 = vmatpush1.bf16.msra.mxu0 0
    %224 = vmatprep.subr.bf16.mxu0 0
    %225 = vmatpush1.bf16.msra.mxu0 0
    %226 = vmatprep.subr.bf16.mxu0 0
    %227 = vmatpush1.bf16.msra.mxu0 0
    %228 = vmatprep.subr.bf16.mxu0 0
    %229 = vmatpush1.bf16.msra.mxu0 0
    %230 = vmatprep.subr.bf16.mxu0 0
    %231 = vmatpush1.bf16.msra.mxu0 0
    %232 = vmatprep.subr.bf16.mxu0 0
    %233 = vmatpush1.bf16.msra.mxu0 0
    %234 = vmatprep.subr.bf16.mxu0 0
    %235 = vmatpush1.bf16.msra.mxu0 0
    %236 = vmatprep.mubr.bf16.mxu0 0
    %237 = vmatmul.mubr.bf16.gmra.mrb[0].mxu0 %v96
    %v238 = vpop.f32.mrb[0].mxu0
    %v239 = vadd.f32 %v117, %v238
    %v240 = vpop.f32.mrb[0].mxu0
    %v241 = vadd.f32 %v121, %v240
    %v242 = vpop.f32.mrb[0].mxu0
    %v243 = vadd.f32 %v117, %v242
    %v244 = vpop.f32.mrb[0].mxu0
    %v245 = vadd.f32 %v121, %v244
    %246 = vdwg.mxu0
    %v247 = vmax.f32 %v239, 0.0
    %v248 = vmax.f32 %v241, 0.0
    %v249 = vmax.f32 %v243, 0.0
    %v250 = vmax.f32 %v245, 0.0
    %s251 = smul.u32 0, 2
    %s252 = smul.addr %s251, 8
    %s253 = scalar_lea.vmem [#allocation2], %s252
    %254 = vst [vmem:[%s253] sm:$0xff] %v247
    %255 = vst [vmem:[%s253 + $0x8] sm:$0xff] %v248
    %256 = vst [vmem:[%s253 + $0x10] sm:$0xff] %v249
    %257 = vst [vmem:[%s253 + $0x18] sm:$0xff] %v250
    // Predicated region
    $region22: #{mlp_hp_forward.1} parent=1 // pred_check
      _
    $region23: #{mlp_hp_forward.1} parent=1 // pred_check_branch
      %259 = sbr.rel (0) target = $region25
    $region24: #{mlp_hp_forward.1} parent=1 // pred_region
      %s261 = ssub.s32 512, 512
      %262 = vsyncadd [#allocation3], %s261
      %s263 = sshll.u32 [#allocation2], 4
      %s264 = int_to_ptr.vmem [resolvable:$true] %s263
      %269 = dma.vmem_to_hbm [thread:$0]  %s264, 512, %s5, [#allocation3], 256, 256, 16
    $region25: #{mlp_hp_forward.1} parent=1 // pred_fallthru
      _
    // Predicated region
    $region26: #{mlp_hp_forward.1} parent=1 // pred_check
      _
    $region27: #{mlp_hp_forward.1} parent=1 // pred_check_branch
      %271 = sbr.rel (0) target = $region29
    $region28: #{mlp_hp_forward.1} parent=1 // pred_region
      %272 = dma.done [#allocation3], 512
    $region29: #{mlp_hp_forward.1} parent=1 // pred_fallthru
      _
    %273 = vsyncpa [#allocation3], 1

</llo_original>
